<compile_context>
chip_gen: v7x
topology: tpu7x:2x2x1
jax: 0.10.0
libtpu: 0.0.40
codegen_flags: <defaults>
</compile_context>

<pallas_src>
import functools

import jax
import jax.numpy as jnp
from jax import lax
from jax.experimental import pallas as pl
from jax.experimental.pallas import tpu as pltpu


def _kd_kernel(ys_ref, yt_ref, partial_ref, *, T: float, B: int, TB: int):
    # Load one (TB, C) batch tile of student/teacher logits; upcast to f32.
    ys = ys_ref[...].astype(jnp.float32) * (1.0 / T)
    yt = yt_ref[...].astype(jnp.float32) * (1.0 / T)

    if B % TB != 0:
        # Last tile is padded: mask out-of-range rows to zero logits.
        # Identical (zero) student/teacher rows give exactly zero KL.
        row = pl.program_id(0) * TB + lax.broadcasted_iota(jnp.int32, (TB, 1), 0)
        valid = row < B
        ys = jnp.where(valid, ys, 0.0)
        yt = jnp.where(valid, yt, 0.0)

    # Student log_softmax along the class (lane) axis.
    ys_shift = ys - jnp.max(ys, axis=-1, keepdims=True)
    log_p_s = ys_shift - jnp.log(jnp.sum(jnp.exp(ys_shift), axis=-1, keepdims=True))

    # Teacher softmax + log_softmax along the class (lane) axis.
    yt_shift = yt - jnp.max(yt, axis=-1, keepdims=True)
    e_t = jnp.exp(yt_shift)
    z_t = jnp.sum(e_t, axis=-1, keepdims=True)
    p_t = e_t * pl.reciprocal(z_t, approx=False)
    log_p_t = yt_shift - jnp.log(z_t)

    # Per-element KL term, reduced over the rows of this tile -> lane-dense
    # (1, C) per-class partial sum for this grid step.
    term = p_t * (log_p_t - log_p_s)                       # (TB, C)
    partial_ref[0] = jnp.sum(term, axis=0, keepdims=True)  # (1, C)


def distill_kl(y_s: jax.Array, y_t: jax.Array, T: float, *, block_rows=None) -> jax.Array:
    """Pallas TPU implementation of DistillKL.forward. Returns a scalar f32."""
    assert y_s.shape == y_t.shape and y_s.ndim == 2
    assert y_s.dtype == y_t.dtype
    B, C = y_s.shape
    itemsize = jnp.dtype(y_s.dtype).itemsize
    sublane = max(8, 32 // itemsize)  # 8 rows for f32, 16 for bf16, 32 for int8

    if block_rows is None:
        # Keep pipeline footprint (2 inputs x 2 buffers x TB*C*itemsize)
        # around <= 24 MiB so it fits every generation's scoped VMEM.
        per_buffer_budget = 6 * 1024 * 1024
        tb = per_buffer_budget // (C * itemsize)
        tb = max(sublane, (tb // sublane) * sublane)
        block_rows = tb
    TB = int(min(B, block_rows))
    # TODO(synk): for vocab-scale C where even a (sublane, C) f32 block exceeds
    # VMEM, add a second "arbitrary" class-tile grid axis with an
    # online-softmax (running max / running sum) scratch.

    num_tiles = pl.cdiv(B, TB)
    kernel = functools.partial(_kd_kernel, T=float(T), B=B, TB=TB)

    cost = pl.CostEstimate(
        flops=10 * B * C,
        transcendentals=2 * B * C,
        bytes_accessed=2 * B * C * itemsize + num_tiles * C * 4,
    )

    partials = pl.pallas_call(
        kernel,
        out_shape=jax.ShapeDtypeStruct((num_tiles, 1, C), jnp.float32),
        grid=(num_tiles,),
        in_specs=[
            pl.BlockSpec((TB, C), lambda i: (i, 0)),
            pl.BlockSpec((TB, C), lambda i: (i, 0)),
        ],
        out_specs=pl.BlockSpec((1, 1, C), lambda i: (i, 0, 0)),
        compiler_params=pltpu.CompilerParams(
            dimension_semantics=("parallel",),
            vmem_limit_bytes=32 * 1024 * 1024,
        ),
        cost_estimate=cost,
    )(y_s, y_t)

    return jnp.sum(partials) * (float(T) ** 2) / B


def _distill_kl_ref(y_s, y_t, T):
    """Pure-JAX reference for sanity checking."""
    log_p_s = jax.nn.log_softmax(y_s / T, axis=1)
    p_t = jax.nn.softmax(y_t / T, axis=1)
    log_p_t = jax.nn.log_softmax(y_t / T, axis=1)
    return jnp.sum(p_t * (log_p_t - log_p_s)) * (T ** 2) / y_s.shape[0]


if __name__ == "__main__":
    T = 4.0
    B, C = 32, 128  # (batch, num_classes) logits

    key = jax.random.PRNGKey(0)
    k1, k2 = jax.random.split(key)
    y_s = jax.random.normal(k1, (B, C), dtype=jnp.float32)
    y_t = jax.random.normal(k2, (B, C), dtype=jnp.float32)

    ref = jax.block_until_ready(_distill_kl_ref(y_s, y_t, T))

    # 1) Default tile size (single grid step at this toy shape).
    loss = jax.block_until_ready(distill_kl(y_s, y_t, T))
    assert jnp.allclose(loss, ref, rtol=1e-5, atol=1e-5), (loss, ref)

    # 2) Batch-tiled grid (4 parallel steps).
    loss_t = jax.block_until_ready(distill_kl(y_s, y_t, T, block_rows=8))
    assert jnp.allclose(loss_t, ref, rtol=1e-5, atol=1e-5), (loss_t, ref)

    # 3) Ragged batch (B not divisible by tile) exercises the in-kernel row mask.
    Br = 20
    loss_r = jax.block_until_ready(distill_kl(y_s[:Br], y_t[:Br], T, block_rows=8))
    ref_r = jax.block_until_ready(_distill_kl_ref(y_s[:Br], y_t[:Br], T))
    assert jnp.allclose(loss_r, ref_r, rtol=1e-5, atol=1e-5), (loss_r, ref_r)

    # 4) bf16 transfer path (halves HBM bytes; compute stays f32 in-kernel).
    ys_bf, yt_bf = y_s.astype(jnp.bfloat16), y_t.astype(jnp.bfloat16)
    loss_bf = jax.block_until_ready(distill_kl(ys_bf, yt_bf, T, block_rows=16))
    ref_bf = jax.block_until_ready(
        _distill_kl_ref(ys_bf.astype(jnp.float32), yt_bf.astype(jnp.float32), T))
    assert jnp.allclose(loss_bf, ref_bf, rtol=1e-4, atol=1e-4), (loss_bf, ref_bf)

    print("KERNEL_OK")
</pallas_src>

<mosaic_0001>
module attributes {stable_mosaic.version = 11 : i64} {
  func.func @_kd_kernel(%arg0: i32, %arg1: memref<32x128xf32, #tpu.memory_space<vmem>>, %arg2: memref<32x128xf32, #tpu.memory_space<vmem>>, %arg3: memref<1x1x128xf32, #tpu.memory_space<vmem>>) attributes {dimension_semantics = [#tpu.dimension_semantics<parallel>], iteration_bounds = array<i64: 1>, scalar_prefetch = 0 : i64, scratch_operands = 0 : i64, tpu.core_type = #tpu.core_type<tc>, window_params = [{transform_indices = @transform_0, window_bounds = array<i64: 32, 128>}, {transform_indices = @transform_1, window_bounds = array<i64: 32, 128>}, {transform_indices = @transform_2, window_bounds = array<i64: 1, 1, 128>}]} {
    %c0 = arith.constant 0 : index
    %c0_0 = arith.constant 0 : index
    %0 = vector.load %arg1[%c0, %c0_0] : memref<32x128xf32, #tpu.memory_space<vmem>>, vector<32x128xf32>
    %cst = arith.constant 2.500000e-01 : f32
    %1 = vector.broadcast %cst : f32 to vector<32x128xf32>
    %2 = arith.mulf %0, %1 : vector<32x128xf32>
    %c0_1 = arith.constant 0 : index
    %c0_2 = arith.constant 0 : index
    %3 = vector.load %arg2[%c0_1, %c0_2] : memref<32x128xf32, #tpu.memory_space<vmem>>, vector<32x128xf32>
    %cst_3 = arith.constant 2.500000e-01 : f32
    %4 = vector.broadcast %cst_3 : f32 to vector<32x128xf32>
    %5 = arith.mulf %3, %4 : vector<32x128xf32>
    %cst_4 = arith.constant dense<0xFF800000> : vector<32xf32>
    %6 = vector.multi_reduction <maximumf>, %2, %cst_4 [1] : vector<32x128xf32> to vector<32xf32>
    %7 = vector.shape_cast %6 : vector<32xf32> to vector<32x1xf32>
    %8 = vector.broadcast %7 : vector<32x1xf32> to vector<32x128xf32>
    %9 = arith.subf %2, %8 : vector<32x128xf32>
    %10 = math.exp %9 : vector<32x128xf32>
    %cst_5 = arith.constant dense<0.000000e+00> : vector<32xf32>
    %11 = vector.multi_reduction <add>, %10, %cst_5 [1] : vector<32x128xf32> to vector<32xf32>
    %12 = vector.shape_cast %11 : vector<32xf32> to vector<32x1xf32>
    %13 = math.log %12 : vector<32x1xf32>
    %14 = vector.broadcast %13 : vector<32x1xf32> to vector<32x128xf32>
    %15 = arith.subf %9, %14 : vector<32x128xf32>
    %cst_6 = arith.constant dense<0xFF800000> : vector<32xf32>
    %16 = vector.multi_reduction <maximumf>, %5, %cst_6 [1] : vector<32x128xf32> to vector<32xf32>
    %17 = vector.shape_cast %16 : vector<32xf32> to vector<32x1xf32>
    %18 = vector.broadcast %17 : vector<32x1xf32> to vector<32x128xf32>
    %19 = arith.subf %5, %18 : vector<32x128xf32>
    %20 = math.exp %19 : vector<32x128xf32>
    %cst_7 = arith.constant dense<0.000000e+00> : vector<32xf32>
    %21 = vector.multi_reduction <add>, %20, %cst_7 [1] : vector<32x128xf32> to vector<32xf32>
    %22 = vector.shape_cast %21 : vector<32xf32> to vector<32x1xf32>
    %23 = tpu.reciprocal %22 : vector<32x1xf32> -> vector<32x1xf32>
    %24 = vector.broadcast %23 : vector<32x1xf32> to vector<32x128xf32>
    %25 = arith.mulf %20, %24 : vector<32x128xf32>
    %26 = math.log %22 : vector<32x1xf32>
    %27 = vector.broadcast %26 : vector<32x1xf32> to vector<32x128xf32>
    %28 = arith.subf %19, %27 : vector<32x128xf32>
    %29 = arith.subf %28, %15 : vector<32x128xf32>
    %30 = arith.mulf %25, %29 : vector<32x128xf32>
    %cst_8 = arith.constant dense<0.000000e+00> : vector<128xf32>
    %31 = vector.multi_reduction <add>, %30, %cst_8 [0] : vector<32x128xf32> to vector<128xf32>
    %32 = vector.shape_cast %31 : vector<128xf32> to vector<1x128xf32>
    %c0_9 = arith.constant 0 : index
    %c0_10 = arith.constant 0 : index
    %c0_11 = arith.constant 0 : index
    %33 = vector.load %arg3[%c0_9, %c0_10, %c0_11] : memref<1x1x128xf32, #tpu.memory_space<vmem>>, vector<1x1x128xf32>
    %34 = vector.shape_cast %33 : vector<1x1x128xf32> to vector<1x128xf32>
    %35 = vector.shape_cast %32 : vector<1x128xf32> to vector<1x1x128xf32>
    tpu.vector_store %arg3[%c0_9, %c0_10, %c0_11], %35 {strides = array<i32>} : memref<1x1x128xf32, #tpu.memory_space<vmem>>, vector<1x1x128xf32>,
    return
  }
  func.func @transform_0(%arg0: i32) -> (i32, i32) {
    %c0_i32 = arith.constant 0 : i32
    %c0_i32_0 = arith.constant 0 : i32
    return %arg0, %c0_i32 : i32, i32
  }
  func.func @transform_1(%arg0: i32) -> (i32, i32) {
    %c0_i32 = arith.constant 0 : i32
    %c0_i32_0 = arith.constant 0 : i32
    return %arg0, %c0_i32 : i32, i32
  }
  func.func @transform_2(%arg0: i32) -> (i32, i32, i32) {
    %c0_i32 = arith.constant 0 : i32
    %c0_i32_0 = arith.constant 0 : i32
    %c0_i32_1 = arith.constant 0 : i32
    return %arg0, %c0_i32, %c0_i32_0 : i32, i32, i32
  }
}

</mosaic_0001>

<llo_original>
// kernel: tpu_custom_call.1
$region0: #{tpu_custom_call.1}
  #allocation0 [shape = 'u32[]', space=smem, size = 0x4, offset = 0x4, fixed_abs, tag = 'smem constant byte address 0x4 - core index']
  #allocation1 [shape = 'u32[144,128]{1,0:T(1,128)}', space=vmem, size = 0x12000, scoped, tag = 'internal scratch']
  %s0 = inlined_call_operand.hbm [shape: f32[32,128], index: 0, kind: input, shape index: {}]
  %s1 = inlined_call_operand.hbm [shape: f32[32,128], index: 1, kind: input, shape index: {}]
  %s2 = inlined_call_operand.hbm [shape: f32[1,1,128], index: 2, kind: output, shape index: {}]
  %s3 = sld [smem:[#allocation0]]
  $region26: #{tpu_custom_call.1} parent=0
    _
  %s5 = ssub.s32 1, %s3
  %s6 = scalar_select 0, %s5, %s3
  $region1: #{tpu_custom_call.1} parent=0
    #allocation2 [shape = 'u8[16384]{0}', space=vmem, size = 0x4000, scoped, tag = 'input window, operand 0, single buffered']
    #allocation3 [shape = 's32[1]{0}', space=sflag, size = 0x4, scoped, tag = 'scoped memory for tpu_custom_call.1']
    #allocation4 [shape = 's32[1]{0}', space=sflag, size = 0x4, scoped, tag = 'scoped memory for tpu_custom_call.1']
    #allocation5 [shape = 'u8[16384]{0}', space=vmem, size = 0x4000, scoped, tag = 'input window, operand 1, single buffered']
    #allocation6 [shape = 's32[1]{0}', space=sflag, size = 0x4, scoped, tag = 'scoped memory for tpu_custom_call.1']
    #allocation7 [shape = 'u8[512]{0}', space=vmem, size = 0x400, scoped, tag = 'output window, operand 0, single buffered']
    %7 = vsyncpa [#allocation3], 0
    %8 = vsyncpa [#allocation6], 0
    %9 = vsyncpa [#allocation4], 0
    // Predicated region
    $region2: #{tpu_custom_call.1} parent=1 // pred_check
      _
    $region3: #{tpu_custom_call.1} parent=1 // pred_check_branch
      %11 = sbr.rel (0) target = $region5
    $region4: #{tpu_custom_call.1} parent=1 // pred_region
      %s13 = ssub.s32 512, 512
      %14 = vsyncadd [#allocation3], %s13
      %s15 = sshll.u32 [#allocation2], 4
      %s16 = int_to_ptr.vmem [resolvable:$true] %s15
      %21 = dma.hbm_to_vmem [thread:$0]  %s0, 512, %s16, [#allocation3], 128, 128, 8
    $region5: #{tpu_custom_call.1} parent=1 // pred_fallthru
      _
    // Predicated region
    $region6: #{tpu_custom_call.1} parent=1 // pred_check
      _
    $region7: #{tpu_custom_call.1} parent=1 // pred_check_branch
      %23 = sbr.rel (0) target = $region9
    $region8: #{tpu_custom_call.1} parent=1 // pred_region
      %s25 = ssub.s32 512, 512
      %26 = vsyncadd [#allocation6], %s25
      %s27 = sshll.u32 [#allocation5], 4
      %s28 = int_to_ptr.vmem [resolvable:$true] %s27
      %33 = dma.hbm_to_vmem [thread:$0]  %s1, 512, %s28, [#allocation6], 128, 128, 8
    $region9: #{tpu_custom_call.1} parent=1 // pred_fallthru
      _
    // Predicated region
    $region10: #{tpu_custom_call.1} parent=1 // pred_check
      _
    $region11: #{tpu_custom_call.1} parent=1 // pred_check_branch
      %35 = sbr.rel (0) target = $region13
    $region12: #{tpu_custom_call.1} parent=1 // pred_region
      %36 = dma.done [#allocation3], 512
    $region13: #{tpu_custom_call.1} parent=1 // pred_fallthru
      _
    // Predicated region
    $region14: #{tpu_custom_call.1} parent=1 // pred_check
      _
    $region15: #{tpu_custom_call.1} parent=1 // pred_check_branch
      %38 = sbr.rel (0) target = $region17
    $region16: #{tpu_custom_call.1} parent=1 // pred_region
      %39 = dma.done [#allocation6], 512
    $region17: #{tpu_custom_call.1} parent=1 // pred_fallthru
      _
    %v40 = vld [vmem:[#allocation2] sm:$0xff]
    %v41 = vld [vmem:[#allocation2 + $0x8] sm:$0xff]
    %v42 = vld [vmem:[#allocation2 + $0x10] sm:$0xff]
    %v43 = vld [vmem:[#allocation2 + $0x18] sm:$0xff]
    %v44 = vmul.f32 %v40, 0.25
    %v45 = vmul.f32 %v41, 0.25
    %v46 = vmul.f32 %v42, 0.25
    %v47 = vmul.f32 %v43, 0.25
    %v48 = vld [vmem:[#allocation5] sm:$0xff]
    %v49 = vld [vmem:[#allocation5 + $0x8] sm:$0xff]
    %v50 = vld [vmem:[#allocation5 + $0x10] sm:$0xff]
    %v51 = vld [vmem:[#allocation5 + $0x18] sm:$0xff]
    %v52 = vmul.f32 %v48, 0.25
    %v53 = vmul.f32 %v49, 0.25
    %v54 = vmul.f32 %v50, 0.25
    %v55 = vmul.f32 %v51, 0.25
    %56 = vmax.xlane.f32.xlu0 %v44
    %v57 = vpop.xlane.xlu0 %56
    %58 = vmax.xlane.f32.xlu0 %v45
    %v59 = vpop.xlane.xlu0 %58
    %60 = vmax.xlane.f32.xlu0 %v46
    %v61 = vpop.xlane.xlu0 %60
    %62 = vmax.xlane.f32.xlu0 %v47
    %v63 = vpop.xlane.xlu0 %62
    %v64 = vsub.f32 %v44, %v57
    %v65 = vsub.f32 %v45, %v59
    %v66 = vsub.f32 %v46, %v61
    %v67 = vsub.f32 %v47, %v63
    %v68 = vmul.f32 %v64, 1.442695
    %v69 = vpow.pop %v68
    %v70 = vmul.f32 %v65, 1.442695
    %v71 = vpow.pop %v70
    %v72 = vmul.f32 %v66, 1.442695
    %v73 = vpow.pop %v72
    %v74 = vmul.f32 %v67, 1.442695
    %v75 = vpow.pop %v74
    %76 = vadd.xlane.f32.xlu0 %v69
    %v77 = vpop.xlane.xlu0 %76
    %78 = vadd.xlane.f32.xlu0 %v71
    %v79 = vpop.xlane.xlu0 %78
    %80 = vadd.xlane.f32.xlu0 %v73
    %v81 = vpop.xlane.xlu0 %80
    %82 = vadd.xlane.f32.xlu0 %v75
    %v83 = vpop.xlane.xlu0 %82
    %v84 = vlog2.pop %v77
    %v85 = vmul.f32 %v84, 0.6931472
    %v86 = vlog2.pop %v79
    %v87 = vmul.f32 %v86, 0.6931472
    %v88 = vlog2.pop %v81
    %v89 = vmul.f32 %v88, 0.6931472
    %v90 = vlog2.pop %v83
    %v91 = vmul.f32 %v90, 0.6931472
    %v92 = vsub.f32 %v64, %v85
    %v93 = vsub.f32 %v65, %v87
    %v94 = vsub.f32 %v66, %v89
    %v95 = vsub.f32 %v67, %v91
    %96 = vmax.xlane.f32.xlu0 %v52
    %v97 = vpop.xlane.xlu0 %96
    %98 = vmax.xlane.f32.xlu0 %v53
    %v99 = vpop.xlane.xlu0 %98
    %100 = vmax.xlane.f32.xlu0 %v54
    %v101 = vpop.xlane.xlu0 %100
    %102 = vmax.xlane.f32.xlu0 %v55
    %v103 = vpop.xlane.xlu0 %102
    %v104 = vsub.f32 %v52, %v97
    %v105 = vsub.f32 %v53, %v99
    %v106 = vsub.f32 %v54, %v101
    %v107 = vsub.f32 %v55, %v103
    %v108 = vmul.f32 %v104, 1.442695
    %v109 = vpow.pop %v108
    %v110 = vmul.f32 %v105, 1.442695
    %v111 = vpow.pop %v110
    %v112 = vmul.f32 %v106, 1.442695
    %v113 = vpow.pop %v112
    %v114 = vmul.f32 %v107, 1.442695
    %v115 = vpow.pop %v114
    %116 = vadd.xlane.f32.xlu0 %v109
    %v117 = vpop.xlane.xlu0 %116
    %118 = vadd.xlane.f32.xlu0 %v111
    %v119 = vpop.xlane.xlu0 %118
    %120 = vadd.xlane.f32.xlu0 %v113
    %v121 = vpop.xlane.xlu0 %120
    %122 = vadd.xlane.f32.xlu0 %v115
    %v123 = vpop.xlane.xlu0 %122
    %v124 = vrcp.pop %v117
    %v125 = vrcp.pop %v119
    %v126 = vrcp.pop %v121
    %v127 = vrcp.pop %v123
    %v128 = vmul.f32 %v109, %v124
    %v129 = vmul.f32 %v111, %v125
    %v130 = vmul.f32 %v113, %v126
    %v131 = vmul.f32 %v115, %v127
    %v132 = vlog2.pop %v117
    %v133 = vmul.f32 %v132, 0.6931472
    %v134 = vlog2.pop %v119
    %v135 = vmul.f32 %v134, 0.6931472
    %v136 = vlog2.pop %v121
    %v137 = vmul.f32 %v136, 0.6931472
    %v138 = vlog2.pop %v123
    %v139 = vmul.f32 %v138, 0.6931472
    %v140 = vsub.f32 %v104, %v133
    %v141 = vsub.f32 %v105, %v135
    %v142 = vsub.f32 %v106, %v137
    %v143 = vsub.f32 %v107, %v139
    %v144 = vsub.f32 %v140, %v92
    %v145 = vsub.f32 %v141, %v93
    %v146 = vsub.f32 %v142, %v94
    %v147 = vsub.f32 %v143, %v95
    %v148 = vmul.f32 %v128, %v144
    %v149 = vmul.f32 %v129, %v145
    %v150 = vmul.f32 %v130, %v146
    %v151 = vmul.f32 %v131, %v147
    %v152 = vadd.f32 %v148, %v149
    %v153 = vadd.f32 %v152, %v150
    %v154 = vadd.f32 %v153, %v151
    %v155 = vrot.slane %v154, 4
    %v156 = vadd.f32 %v154, %v155
    %v157 = vrot.slane %v156, 2
    %v158 = vadd.f32 %v156, %v157
    %v159 = vrot.slane %v158, 1
    %v160 = vadd.f32 %v158, %v159
    %161 = vst [vmem:[#allocation7] sm:$0x1] %v160
    // Predicated region
    $region18: #{tpu_custom_call.1} parent=1 // pred_check
      _
    $region19: #{tpu_custom_call.1} parent=1 // pred_check_branch
      %163 = sbr.rel (0) target = $region21
    $region20: #{tpu_custom_call.1} parent=1 // pred_region
      %s165 = ssub.s32 16, 16
      %166 = vsyncadd [#allocation4], %s165
      %s168 = sshll.u32 [#allocation7], 4
      %s169 = int_to_ptr.vmem [resolvable:$true] %s168
      %171 = dma.vmem_to_hbm [thread:$0]  %s169, 16, %s2, [#allocation4]
    $region21: #{tpu_custom_call.1} parent=1 // pred_fallthru
      _
    // Predicated region
    $region22: #{tpu_custom_call.1} parent=1 // pred_check
      _
    $region23: #{tpu_custom_call.1} parent=1 // pred_check_branch
      %173 = sbr.rel (0) target = $region25
    $region24: #{tpu_custom_call.1} parent=1 // pred_region
      %174 = dma.done [#allocation4], 16
    $region25: #{tpu_custom_call.1} parent=1 // pred_fallthru
      _
    %175 = vsyncpa [#allocation3], 1
    %176 = vsyncpa [#allocation6], 1
    %177 = vsyncpa [#allocation4], 1

</llo_original>
